<compile_context>
chip_gen: v5e
topology: v5e:2x2
jax: 0.10.0
libtpu: 0.0.40
codegen_flags: <defaults>
</compile_context>

<pallas_src>
import jax
import jax.numpy as jnp
from jax.experimental import pallas as pl
from jax.experimental.pallas import tpu as pltpu


def _round_up(n, m):
    return ((n + m - 1) // m) * m


def mlp_dropout_kernel(x_ref, w1_ref, b1_ref, w2_ref, b2_ref, w3_ref, b3_ref, out_ref):
    # --- pooling over the clip/time axis: sum only; the 1/T scale is folded
    #     into w1 on the host (f32 accumulation of the bf16 input tile). ---
    pooled = jnp.sum(x_ref[...].astype(jnp.float32), axis=1)          # (TB, D)

    # --- Linear(D -> 512) with BatchNorm1d (eval) + 1/T pre-folded into w1/b1 ---
    h1 = jnp.dot(pooled.astype(jnp.bfloat16), w1_ref[...],
                 preferred_element_type=jnp.float32) + b1_ref[...]
    h1 = jnp.maximum(h1, 0.0)                                         # ReLU
    # Dropout(0.5) is identity at inference.
    # TODO(synk): training-mode dropout (pltpu.prng_random_bits mask) not emitted here.

    # --- Linear(512 -> 256) + ReLU ---
    h2 = jnp.dot(h1.astype(jnp.bfloat16), w2_ref[...],
                 preferred_element_type=jnp.float32) + b2_ref[...]
    h2 = jnp.maximum(h2, 0.0)

    # --- Linear(256 -> num_class), N padded to 128 lanes (sliced in wrapper) ---
    out = jnp.dot(h2.astype(jnp.bfloat16), w3_ref[...],
                  preferred_element_type=jnp.float32) + b3_ref[...]
    out_ref[...] = out.astype(out_ref.dtype)


def mlp_with_dropout_forward(x, params, *, batch_tile=128):
    """x: (B, T, clip_feature_dim) float32.  Returns (B, num_class) float32.

    batch_tile: rows of x processed per grid step.  128 keeps the MXU M tile full
    on v5e; 256+ is reasonable on v6e/v7x if the x tile (2 buffers) plus resident
    weights fits scoped VMEM (mind v7x's 64 MiB total / ~32 MiB default scoped).
    """
    B, T, D = x.shape
    num_class = params["w3"].shape[1]
    eps = 1e-5

    # ---- host-side folding: BN(eval) scale/shift + 1/T mean into Linear #1 ----
    scale = params["gamma"] * jax.lax.rsqrt(params["running_var"] + eps)     # (1, H1)
    w1f = (params["w1"] * scale * (1.0 / T)).astype(jnp.bfloat16)            # (D, H1)
    b1f = ((params["b1"] - params["running_mean"]) * scale
           + params["beta"]).astype(jnp.float32)                             # (1, H1)
    w2 = params["w2"].astype(jnp.bfloat16)
    b2 = params["b2"].astype(jnp.float32)

    # ---- pad the final projection to a full 128-lane N tile ----
    nc_pad = _round_up(max(num_class, 128), 128)
    w3p = jnp.pad(params["w3"], ((0, 0), (0, nc_pad - num_class))).astype(jnp.bfloat16)
    b3p = jnp.pad(params["b3"], ((0, 0), (0, nc_pad - num_class))).astype(jnp.float32)

    H1 = w1f.shape[1]
    H2 = w2.shape[1]

    # ---- batch tiling: pad B up to a sublane-friendly tile ----
    tb = batch_tile if B >= batch_tile else _round_up(B, 8)
    b_pad = _round_up(B, tb)
    xb = x.astype(jnp.bfloat16)
    if b_pad != B:
        xb = jnp.pad(xb, ((0, b_pad - B), (0, 0), (0, 0)))

    grid = (b_pad // tb,)
    out = pl.pallas_call(
        mlp_dropout_kernel,
        out_shape=jax.ShapeDtypeStruct((b_pad, nc_pad), jnp.float32),
        grid=grid,
        in_specs=[
            pl.BlockSpec((tb, T, D), lambda i: (i, 0, 0)),     # x tile (pipelined)
            pl.BlockSpec((D, H1), lambda i: (0, 0)),           # w1 (resident)
            pl.BlockSpec((1, H1), lambda i: (0, 0)),           # b1 (resident)
            pl.BlockSpec((H1, H2), lambda i: (0, 0)),          # w2 (resident)
            pl.BlockSpec((1, H2), lambda i: (0, 0)),           # b2 (resident)
            pl.BlockSpec((H2, nc_pad), lambda i: (0, 0)),      # w3 (resident)
            pl.BlockSpec((1, nc_pad), lambda i: (0, 0)),       # b3 (resident)
        ],
        out_specs=pl.BlockSpec((tb, nc_pad), lambda i: (i, 0)),
        compiler_params=pltpu.CompilerParams(
            dimension_semantics=("parallel",)),
    )(xb, w1f, b1f, w2, b2, w3p, b3p)

    return out[:B, :num_class]


def init_params(key, clip_feature_dim, num_class, num_bottleneck=512, num_bottleneck1=256):
    """Deterministic synthetic parameters matching nn.Linear / nn.BatchNorm1d shapes.
    Linear weights are stored transposed: (in_features, out_features)."""
    ks = jax.random.split(key, 8)

    def lin(kw, kb, fan_in, fan_out):
        bound = 1.0 / jnp.sqrt(fan_in)
        w = jax.random.uniform(kw, (fan_in, fan_out), jnp.float32, -bound, bound)
        b = jax.random.uniform(kb, (1, fan_out), jnp.float32, -bound, bound)
        return w, b

    w1, b1 = lin(ks[0], ks[1], clip_feature_dim, num_bottleneck)
    w2, b2 = lin(ks[2], ks[3], num_bottleneck, num_bottleneck1)
    w3, b3 = lin(ks[4], ks[5], num_bottleneck1, num_class)

    # BatchNorm1d(num_bottleneck) parameters / running stats (PyTorch default init).
    gamma = jnp.ones((1, num_bottleneck), jnp.float32)
    beta = jnp.zeros((1, num_bottleneck), jnp.float32)
    running_mean = jnp.zeros((1, num_bottleneck), jnp.float32)
    running_var = jnp.ones((1, num_bottleneck), jnp.float32)

    return dict(w1=w1, b1=b1, w2=w2, b2=b2, w3=w3, b3=b3,
                gamma=gamma, beta=beta,
                running_mean=running_mean, running_var=running_var)


def reference_forward(x, p):
    """Pure-JAX f32 reference matching the PyTorch module (eval mode)."""
    pooled = jnp.mean(x, axis=1)
    h1 = pooled @ p["w1"] + p["b1"]
    h1 = (h1 - p["running_mean"]) * jax.lax.rsqrt(p["running_var"] + 1e-5) * p["gamma"] + p["beta"]
    h1 = jnp.maximum(h1, 0.0)
    h2 = jnp.maximum(h1 @ p["w2"] + p["b2"], 0.0)
    return h2 @ p["w3"] + p["b3"]


if __name__ == "__main__":
    # Small shapes consistent with the module's forward: x is (batch, num_clips, clip_feature_dim).
    B, T, clip_feature_dim, num_class = 2, 8, 64, 10

    key = jax.random.PRNGKey(0)
    k_x, k_p = jax.random.split(key)
    x = jax.random.normal(k_x, (B, T, clip_feature_dim), jnp.float32)
    params = init_params(k_p, clip_feature_dim, num_class)

    out = mlp_with_dropout_forward(x, params)
    out = jax.block_until_ready(out)

    ref = reference_forward(x, params)
    assert out.shape == (B, num_class)
    # bf16 MXU operands -> relaxed tolerance vs the f32 reference.
    assert jnp.allclose(out, ref, atol=2e-2, rtol=2e-2), "Pallas kernel mismatch vs reference"

    print("KERNEL_OK")
</pallas_src>

<mosaic_0001>
module attributes {stable_mosaic.version = 11 : i64} {
  func.func @mlp_dropout_kernel(%arg0: i32, %arg1: memref<8x8x64xbf16, #tpu.memory_space<vmem>>, %arg2: memref<64x512xbf16, #tpu.memory_space<vmem>>, %arg3: memref<1x512xf32, #tpu.memory_space<vmem>>, %arg4: memref<512x256xbf16, #tpu.memory_space<vmem>>, %arg5: memref<1x256xf32, #tpu.memory_space<vmem>>, %arg6: memref<256x128xbf16, #tpu.memory_space<vmem>>, %arg7: memref<1x128xf32, #tpu.memory_space<vmem>>, %arg8: memref<8x128xf32, #tpu.memory_space<vmem>>) attributes {dimension_semantics = [#tpu.dimension_semantics<parallel>], iteration_bounds = array<i64: 1>, scalar_prefetch = 0 : i64, scratch_operands = 0 : i64, tpu.core_type = #tpu.core_type<tc>, window_params = [{transform_indices = @transform_0, window_bounds = array<i64: 8, 8, 64>}, {pipeline_mode = #tpu.pipeline_mode<synchronous>, transform_indices = @transform_1, window_bounds = array<i64: 64, 512>}, {pipeline_mode = #tpu.pipeline_mode<synchronous>, transform_indices = @transform_2, window_bounds = array<i64: 1, 512>}, {pipeline_mode = #tpu.pipeline_mode<synchronous>, transform_indices = @transform_3, window_bounds = array<i64: 512, 256>}, {pipeline_mode = #tpu.pipeline_mode<synchronous>, transform_indices = @transform_4, window_bounds = array<i64: 1, 256>}, {pipeline_mode = #tpu.pipeline_mode<synchronous>, transform_indices = @transform_5, window_bounds = array<i64: 256, 128>}, {pipeline_mode = #tpu.pipeline_mode<synchronous>, transform_indices = @transform_6, window_bounds = array<i64: 1, 128>}, {transform_indices = @transform_7, window_bounds = array<i64: 8, 128>}]} {
    %c0 = arith.constant 0 : index
    %c0_0 = arith.constant 0 : index
    %c0_1 = arith.constant 0 : index
    %0 = vector.load %arg1[%c0, %c0_0, %c0_1] : memref<8x8x64xbf16, #tpu.memory_space<vmem>>, vector<8x8x64xbf16>
    %1 = arith.extf %0 : vector<8x8x64xbf16> to vector<8x8x64xf32>
    %cst = arith.constant dense<0.000000e+00> : vector<8x64xf32>
    %2 = vector.multi_reduction <add>, %1, %cst [1] : vector<8x8x64xf32> to vector<8x64xf32>
    %3 = arith.truncf %2 : vector<8x64xf32> to vector<8x64xbf16>
    %c0_2 = arith.constant 0 : index
    %c0_3 = arith.constant 0 : index
    %4 = vector.load %arg2[%c0_2, %c0_3] : memref<64x512xbf16, #tpu.memory_space<vmem>>, vector<64x512xbf16>
    %cst_4 = arith.constant dense<0.000000e+00> : vector<8x512xf32>
    %5 = tpu.matmul %3, %4, %cst_4 {dimension_numbers = #tpu.dot_dimension_numbers<[1], [0], [0], [1], [0, 0, 1, 1], [], []>} : vector<8x64xbf16>, vector<64x512xbf16>, vector<8x512xf32> -> vector<8x512xf32>
    %c0_5 = arith.constant 0 : index
    %c0_6 = arith.constant 0 : index
    %6 = vector.load %arg3[%c0_5, %c0_6] : memref<1x512xf32, #tpu.memory_space<vmem>>, vector<1x512xf32>
    %7 = vector.broadcast %6 : vector<1x512xf32> to vector<8x512xf32>
    %8 = arith.addf %5, %7 : vector<8x512xf32>
    %cst_7 = arith.constant 0.000000e+00 : f32
    %9 = vector.broadcast %cst_7 : f32 to vector<8x512xf32>
    %10 = arith.maximumf %8, %9 : vector<8x512xf32>
    %11 = arith.truncf %10 : vector<8x512xf32> to vector<8x512xbf16>
    %c0_8 = arith.constant 0 : index
    %c0_9 = arith.constant 0 : index
    %12 = vector.load %arg4[%c0_8, %c0_9] : memref<512x256xbf16, #tpu.memory_space<vmem>>, vector<512x256xbf16>
    %cst_10 = arith.constant dense<0.000000e+00> : vector<8x256xf32>
    %13 = tpu.matmul %11, %12, %cst_10 {dimension_numbers = #tpu.dot_dimension_numbers<[1], [0], [0], [1], [0, 0, 1, 1], [], []>} : vector<8x512xbf16>, vector<512x256xbf16>, vector<8x256xf32> -> vector<8x256xf32>
    %c0_11 = arith.constant 0 : index
    %c0_12 = arith.constant 0 : index
    %14 = vector.load %arg5[%c0_11, %c0_12] : memref<1x256xf32, #tpu.memory_space<vmem>>, vector<1x256xf32>
    %15 = vector.broadcast %14 : vector<1x256xf32> to vector<8x256xf32>
    %16 = arith.addf %13, %15 : vector<8x256xf32>
    %cst_13 = arith.constant 0.000000e+00 : f32
    %17 = vector.broadcast %cst_13 : f32 to vector<8x256xf32>
    %18 = arith.maximumf %16, %17 : vector<8x256xf32>
    %19 = arith.truncf %18 : vector<8x256xf32> to vector<8x256xbf16>
    %c0_14 = arith.constant 0 : index
    %c0_15 = arith.constant 0 : index
    %20 = vector.load %arg6[%c0_14, %c0_15] : memref<256x128xbf16, #tpu.memory_space<vmem>>, vector<256x128xbf16>
    %cst_16 = arith.constant dense<0.000000e+00> : vector<8x128xf32>
    %21 = tpu.matmul %19, %20, %cst_16 {dimension_numbers = #tpu.dot_dimension_numbers<[1], [0], [0], [1], [0, 0, 1, 1], [], []>} : vector<8x256xbf16>, vector<256x128xbf16>, vector<8x128xf32> -> vector<8x128xf32>
    %c0_17 = arith.constant 0 : index
    %c0_18 = arith.constant 0 : index
    %22 = vector.load %arg7[%c0_17, %c0_18] : memref<1x128xf32, #tpu.memory_space<vmem>>, vector<1x128xf32>
    %23 = vector.broadcast %22 : vector<1x128xf32> to vector<8x128xf32>
    %24 = arith.addf %21, %23 : vector<8x128xf32>
    %c0_19 = arith.constant 0 : index
    %c0_20 = arith.constant 0 : index
    %25 = vector.load %arg8[%c0_19, %c0_20] : memref<8x128xf32, #tpu.memory_space<vmem>>, vector<8x128xf32>
    tpu.vector_store %arg8[%c0_19, %c0_20], %24 {strides = array<i32>} : memref<8x128xf32, #tpu.memory_space<vmem>>, vector<8x128xf32>,
    return
  }
  func.func @transform_0(%arg0: i32) -> (i32, i32, i32) {
    %c0_i32 = arith.constant 0 : i32
    %c0_i32_0 = arith.constant 0 : i32
    %c0_i32_1 = arith.constant 0 : i32
    return %arg0, %c0_i32, %c0_i32_0 : i32, i32, i32
  }
  func.func @transform_1(%arg0: i32) -> (i32, i32) {
    %c0_i32 = arith.constant 0 : i32
    %c0_i32_0 = arith.constant 0 : i32
    %c0_i32_1 = arith.constant 0 : i32
    return %c0_i32, %c0_i32_0 : i32, i32
  }
  func.func @transform_2(%arg0: i32) -> (i32, i32) {
    %c0_i32 = arith.constant 0 : i32
    %c0_i32_0 = arith.constant 0 : i32
    %c0_i32_1 = arith.constant 0 : i32
    return %c0_i32, %c0_i32_0 : i32, i32
  }
  func.func @transform_3(%arg0: i32) -> (i32, i32) {
    %c0_i32 = arith.constant 0 : i32
    %c0_i32_0 = arith.constant 0 : i32
    %c0_i32_1 = arith.constant 0 : i32
    return %c0_i32, %c0_i32_0 : i32, i32
  }
  func.func @transform_4(%arg0: i32) -> (i32, i32) {
    %c0_i32 = arith.constant 0 : i32
    %c0_i32_0 = arith.constant 0 : i32
    %c0_i32_1 = arith.constant 0 : i32
    return %c0_i32, %c0_i32_0 : i32, i32
  }
  func.func @transform_5(%arg0: i32) -> (i32, i32) {
    %c0_i32 = arith.constant 0 : i32
    %c0_i32_0 = arith.constant 0 : i32
    %c0_i32_1 = arith.constant 0 : i32
    return %c0_i32, %c0_i32_0 : i32, i32
  }
  func.func @transform_6(%arg0: i32) -> (i32, i32) {
    %c0_i32 = arith.constant 0 : i32
    %c0_i32_0 = arith.constant 0 : i32
    %c0_i32_1 = arith.constant 0 : i32
    return %c0_i32, %c0_i32_0 : i32, i32
  }
  func.func @transform_7(%arg0: i32) -> (i32, i32) {
    %c0_i32 = arith.constant 0 : i32
    %c0_i32_0 = arith.constant 0 : i32
    return %arg0, %c0_i32 : i32, i32
  }
}

</mosaic_0001>

<llo_original>
// kernel: tpu_custom_call.1
$region0: #{tpu_custom_call.1}
  #allocation0 [shape = 'u32[]', space=smem, size = 0x4, offset = 0x4, fixed_abs, tag = 'smem constant byte address 0x4 - core index']
  #allocation1 [shape = 'u32[72,128]{1,0:T(1,128)}', space=vmem, size = 0x9000, scoped, tag = 'internal scratch']
  %s0 = inlined_call_operand.hbm [shape: bf16[8,8,64], index: 0, kind: input, shape index: {}]
  %s1 = inlined_call_operand.hbm [shape: bf16[64,512], index: 1, kind: input, shape index: {}]
  %s2 = inlined_call_operand.hbm [shape: f32[1,512], index: 2, kind: input, shape index: {}]
  %s3 = inlined_call_operand.hbm [shape: bf16[512,256], index: 3, kind: input, shape index: {}]
  %s4 = inlined_call_operand.vmem [shape: f32[1,256], index: 4, kind: input, shape index: {}]
  %s5 = inlined_call_operand.hbm [shape: bf16[256,128], index: 5, kind: input, shape index: {}]
  %s6 = inlined_call_operand.vmem [shape: f32[1,128], index: 6, kind: input, shape index: {}]
  %s7 = inlined_call_operand.hbm [shape: f32[8,128], index: 7, kind: output, shape index: {}]
  %s8 = sld [smem:[#allocation0]]
  $region58: #{tpu_custom_call.1} parent=0
    _
  %s10 = ssub.s32 1, %s8
  %s11 = scalar_select 0, %s10, %s8
  $region1: #{tpu_custom_call.1} parent=0
    #allocation2 [shape = 'u8[16384]{0}', space=vmem, size = 0x4000, scoped, tag = 'input window, operand 0, single buffered']
    #allocation3 [shape = 's32[1]{0}', space=sflag, size = 0x4, scoped, tag = 'scoped memory for tpu_custom_call.1']
    #allocation4 [shape = 's32[1]{0}', space=sflag, size = 0x4, scoped, tag = 'scoped memory for tpu_custom_call.1']
    #allocation5 [shape = 'u8[65536]{0}', space=vmem, size = 0x10000, scoped, tag = 'input window, operand 1, single buffered']
    #allocation6 [shape = 's32[1]{0}', space=sflag, size = 0x4, scoped, tag = 'scoped memory for tpu_custom_call.1']
    #allocation7 [shape = 'u8[2048]{0}', space=vmem, size = 0x800, scoped, tag = 'input window, operand 2, single buffered']
    #allocation8 [shape = 'u8[262144]{0}', space=vmem, size = 0x40000, scoped, tag = 'input window, operand 3, single buffered']
    #allocation9 [shape = 's32[1]{0}', space=sflag, size = 0x4, scoped, tag = 'scoped memory for tpu_custom_call.1']
    #allocation10 [shape = 'u8[65536]{0}', space=vmem, size = 0x10000, scoped, tag = 'input window, operand 5, single buffered']
    #allocation11 [shape = 'u8[4096]{0}', space=vmem, size = 0x1000, scoped, tag = 'output window, operand 0, single buffered']
    %12 = vsyncpa [#allocation3], 0
    %13 = vsyncpa [#allocation6], 0
    %14 = vsyncpa [#allocation9], 0
    %15 = vsyncpa [#allocation4], 0
    // Predicated region
    $region2: #{tpu_custom_call.1} parent=1 // pred_check
      _
    $region3: #{tpu_custom_call.1} parent=1 // pred_check_branch
      %17 = sbr.rel (0) target = $region5
    $region4: #{tpu_custom_call.1} parent=1 // pred_region
      %19 = vsyncadd [#allocation3], 0
      %s20 = sshll.u32 %s0, 4
      %s21 = int_to_ptr.hbm [resolvable:$true] %s20
      %s22 = sshll.u32 [#allocation2], 4
      %s23 = int_to_ptr.vmem [resolvable:$true] %s22
      %28 = dma.hbm_to_vmem [thread:$0]  %s21, 512, %s23, [#allocation3], 64, 64, 4
    $region5: #{tpu_custom_call.1} parent=1 // pred_fallthru
      _
    // Predicated region
    $region6: #{tpu_custom_call.1} parent=1 // pred_check
      _
    $region7: #{tpu_custom_call.1} parent=1 // pred_check_branch
      %30 = sbr.rel (0) target = $region9
    $region8: #{tpu_custom_call.1} parent=1 // pred_region
      %32 = vsyncadd [#allocation6], 0
      %s33 = sshll.u32 %s1, 4
      %s34 = int_to_ptr.hbm [resolvable:$true] %s33
      %s35 = sshll.u32 [#allocation5], 4
      %s36 = int_to_ptr.vmem [resolvable:$true] %s35
      %41 = dma.hbm_to_vmem [thread:$0]  %s34, 2048, %s36, [#allocation6], 256, 256, 16
    $region9: #{tpu_custom_call.1} parent=1 // pred_fallthru
      _
    // Predicated region
    $region10: #{tpu_custom_call.1} parent=1 // pred_check
      _
    $region11: #{tpu_custom_call.1} parent=1 // pred_check_branch
      %43 = sbr.rel (0) target = $region13
    $region12: #{tpu_custom_call.1} parent=1 // pred_region
      %45 = vsyncadd [#allocation6], 0
      %s47 = sshll.u32 %s2, 4
      %s48 = int_to_ptr.hbm [resolvable:$true] %s47
      %s49 = sshll.u32 [#allocation7], 4
      %s50 = int_to_ptr.vmem [resolvable:$true] %s49
      %52 = dma.hbm_to_vmem [thread:$0]  %s48, 64, %s50, [#allocation6]
    $region13: #{tpu_custom_call.1} parent=1 // pred_fallthru
      _
    // Predicated region
    $region14: #{tpu_custom_call.1} parent=1 // pred_check
      _
    $region15: #{tpu_custom_call.1} parent=1 // pred_check_branch
      %54 = sbr.rel (0) target = $region17
    $region16: #{tpu_custom_call.1} parent=1 // pred_region
      %56 = vsyncadd [#allocation9], 0
      %s57 = sshll.u32 %s3, 4
      %s58 = int_to_ptr.hbm [resolvable:$true] %s57
      %s59 = sshll.u32 [#allocation8], 4
      %s60 = int_to_ptr.vmem [resolvable:$true] %s59
      %65 = dma.hbm_to_vmem [thread:$0]  %s58, 8192, %s60, [#allocation9], 128, 128, 8
    $region17: #{tpu_custom_call.1} parent=1 // pred_fallthru
      _
    // Predicated region
    $region18: #{tpu_custom_call.1} parent=1 // pred_check
      _
    $region19: #{tpu_custom_call.1} parent=1 // pred_check_branch
      %67 = sbr.rel (0) target = $region21
    $region20: #{tpu_custom_call.1} parent=1 // pred_region
      _
    $region21: #{tpu_custom_call.1} parent=1 // pred_fallthru
      _
    // Predicated region
    $region22: #{tpu_custom_call.1} parent=1 // pred_check
      _
    $region23: #{tpu_custom_call.1} parent=1 // pred_check_branch
      %69 = sbr.rel (0) target = $region25
    $region24: #{tpu_custom_call.1} parent=1 // pred_region
      %71 = vsyncadd [#allocation9], 0
      %s72 = sshll.u32 %s5, 4
      %s73 = int_to_ptr.hbm [resolvable:$true] %s72
      %s74 = sshll.u32 [#allocation10], 4
      %s75 = int_to_ptr.vmem [resolvable:$true] %s74
      %80 = dma.hbm_to_vmem [thread:$0]  %s73, 2048, %s75, [#allocation9], 64, 64, 4
    $region25: #{tpu_custom_call.1} parent=1 // pred_fallthru
      _
    // Predicated region
    $region26: #{tpu_custom_call.1} parent=1 // pred_check
      _
    $region27: #{tpu_custom_call.1} parent=1 // pred_check_branch
      %82 = sbr.rel (0) target = $region29
    $region28: #{tpu_custom_call.1} parent=1 // pred_region
      _
    $region29: #{tpu_custom_call.1} parent=1 // pred_fallthru
      _
    // Predicated region
    $region30: #{tpu_custom_call.1} parent=1 // pred_check
      _
    $region31: #{tpu_custom_call.1} parent=1 // pred_check_branch
      %84 = sbr.rel (0) target = $region33
    $region32: #{tpu_custom_call.1} parent=1 // pred_region
      %86 = dma.done [#allocation3], 512
    $region33: #{tpu_custom_call.1} parent=1 // pred_fallthru
      _
    // Predicated region
    $region34: #{tpu_custom_call.1} parent=1 // pred_check
      _
    $region35: #{tpu_custom_call.1} parent=1 // pred_check_branch
      %88 = sbr.rel (0) target = $region37
    $region36: #{tpu_custom_call.1} parent=1 // pred_region
      %90 = dma.done [#allocation6], 2048
    $region37: #{tpu_custom_call.1} parent=1 // pred_fallthru
      _
    // Predicated region
    $region38: #{tpu_custom_call.1} parent=1 // pred_check
      _
    $region39: #{tpu_custom_call.1} parent=1 // pred_check_branch
      %92 = sbr.rel (0) target = $region41
    $region40: #{tpu_custom_call.1} parent=1 // pred_region
      %94 = dma.done [#allocation6], 64
    $region41: #{tpu_custom_call.1} parent=1 // pred_fallthru
      _
    // Predicated region
    $region42: #{tpu_custom_call.1} parent=1 // pred_check
      _
    $region43: #{tpu_custom_call.1} parent=1 // pred_check_branch
      %96 = sbr.rel (0) target = $region45
    $region44: #{tpu_custom_call.1} parent=1 // pred_region
      %98 = dma.done [#allocation9], 8192
    $region45: #{tpu_custom_call.1} parent=1 // pred_fallthru
      _
    // Predicated region
    $region46: #{tpu_custom_call.1} parent=1 // pred_check
      _
    $region47: #{tpu_custom_call.1} parent=1 // pred_check_branch
      %100 = sbr.rel (0) target = $region49
    $region48: #{tpu_custom_call.1} parent=1 // pred_region
      %102 = dma.done [#allocation9], 2048
    $region49: #{tpu_custom_call.1} parent=1 // pred_fallthru
      _
    %v104 = vld [vmem:[#allocation2] sm:$0xf]
    %v105 = vld [vmem:[#allocation2 + $0x4] sm:$0xf]
    %v106 = vld [vmem:[#allocation2 + $0x8] sm:$0xf]
    %v107 = vld [vmem:[#allocation2 + $0xc] sm:$0xf]
    %v108 = vld [vmem:[#allocation2 + $0x10] sm:$0xf]
    %v109 = vld [vmem:[#allocation2 + $0x14] sm:$0xf]
    %v110 = vld [vmem:[#allocation2 + $0x18] sm:$0xf]
    %v111 = vld [vmem:[#allocation2 + $0x1c] sm:$0xf]
    %v112 = vunpack.c.l.bf16 %v104
    %v113 = vunpack.c.l.bf16 %v105
    %v114 = vunpack.c.l.bf16 %v106
    %v115 = vunpack.c.l.bf16 %v107
    %v116 = vunpack.c.l.bf16 %v108
    %v117 = vunpack.c.l.bf16 %v109
    %v118 = vunpack.c.l.bf16 %v110
    %v119 = vunpack.c.l.bf16 %v111
    %vm120 = vcmask 523264
    %v121 = vsel %vm120, %v112, 0.0
    %v122 = vrot.slane %v121, 4
    %v123 = vadd.f32 %v121, %v122
    %v124 = vrot.slane %v123, 2
    %v125 = vadd.f32 %v123, %v124
    %v126 = vrot.slane %v125, 1
    %v127 = vadd.f32 %v125, %v126
    %v128 = vsel %vm120, %v113, 0.0
    %v129 = vrot.slane %v128, 4
    %v130 = vadd.f32 %v128, %v129
    %v131 = vrot.slane %v130, 2
    %v132 = vadd.f32 %v130, %v131
    %v133 = vrot.slane %v132, 1
    %v134 = vadd.f32 %v132, %v133
    %v135 = vsel %vm120, %v114, 0.0
    %v136 = vrot.slane %v135, 4
    %v137 = vadd.f32 %v135, %v136
    %v138 = vrot.slane %v137, 2
    %v139 = vadd.f32 %v137, %v138
    %v140 = vrot.slane %v139, 1
    %v141 = vadd.f32 %v139, %v140
    %v142 = vsel %vm120, %v115, 0.0
    %v143 = vrot.slane %v142, 4
    %v144 = vadd.f32 %v142, %v143
    %v145 = vrot.slane %v144, 2
    %v146 = vadd.f32 %v144, %v145
    %v147 = vrot.slane %v146, 1
    %v148 = vadd.f32 %v146, %v147
    %v149 = vsel %vm120, %v116, 0.0
    %v150 = vrot.slane %v149, 4
    %v151 = vadd.f32 %v149, %v150
    %v152 = vrot.slane %v151, 2
    %v153 = vadd.f32 %v151, %v152
    %v154 = vrot.slane %v153, 1
    %v155 = vadd.f32 %v153, %v154
    %v156 = vsel %vm120, %v117, 0.0
    %v157 = vrot.slane %v156, 4
    %v158 = vadd.f32 %v156, %v157
    %v159 = vrot.slane %v158, 2
    %v160 = vadd.f32 %v158, %v159
    %v161 = vrot.slane %v160, 1
    %v162 = vadd.f32 %v160, %v161
    %v163 = vsel %vm120, %v118, 0.0
    %v164 = vrot.slane %v163, 4
    %v165 = vadd.f32 %v163, %v164
    %v166 = vrot.slane %v165, 2
    %v167 = vadd.f32 %v165, %v166
    %v168 = vrot.slane %v167, 1
    %v169 = vadd.f32 %v167, %v168
    %v170 = vsel %vm120, %v119, 0.0
    %v171 = vrot.slane %v170, 4
    %v172 = vadd.f32 %v170, %v171
    %v173 = vrot.slane %v172, 2
    %v174 = vadd.f32 %v172, %v173
    %v175 = vrot.slane %v174, 1
    %v176 = vadd.f32 %v174, %v175
    %v177 = vpack.c.bf16 %v127, %v127
    %v178 = vpack.c.bf16 %v134, %v134
    %v179 = vpack.c.bf16 %v141, %v141
    %v180 = vpack.c.bf16 %v148, %v148
    %v181 = vpack.c.bf16 %v155, %v155
    %v182 = vpack.c.bf16 %v162, %v162
    %v183 = vpack.c.bf16 %v169, %v169
    %v184 = vpack.c.bf16 %v176, %v176
    %v185 = vld [vmem:[#allocation5] sm:$0xff]
    %v186 = vld [vmem:[#allocation5 + $0x8] sm:$0xff]
    %v187 = vld [vmem:[#allocation5 + $0x10] sm:$0xff]
    %v188 = vld [vmem:[#allocation5 + $0x18] sm:$0xff]
    %v189 = vld [vmem:[#allocation5 + $0x20] sm:$0xff]
    %v190 = vld [vmem:[#allocation5 + $0x28] sm:$0xff]
    %v191 = vld [vmem:[#allocation5 + $0x30] sm:$0xff]
    %v192 = vld [vmem:[#allocation5 + $0x38] sm:$0xff]
    %v193 = vld [vmem:[#allocation5 + $0x40] sm:$0xff]
    %v194 = vld [vmem:[#allocation5 + $0x48] sm:$0xff]
    %v195 = vld [vmem:[#allocation5 + $0x50] sm:$0xff]
    %v196 = vld [vmem:[#allocation5 + $0x58] sm:$0xff]
    %v197 = vld [vmem:[#allocation5 + $0x60] sm:$0xff]
    %v198 = vld [vmem:[#allocation5 + $0x68] sm:$0xff]
    %v199 = vld [vmem:[#allocation5 + $0x70] sm:$0xff]
    %v200 = vld [vmem:[#allocation5 + $0x78] sm:$0xff]
    %v201 = vld [vmem:[#allocation7] sm:$0xf]
    %v203 = vperm.slane %v201, 0
    %v204 = vperm.slane %v201, 1
    %v205 = vperm.slane %v201, 2
    %v206 = vperm.slane %v201, 3
    %v219 = vunpack.c.l.b16 %v177
    %v220 = vunpack.c.l.b16 %v178
    %v221 = vunpack.c.l.b16 %v179
    %v222 = vunpack.c.l.b16 %v180
    %v223 = vunpack.c.l.b16 %v181
    %v224 = vunpack.c.l.b16 %v182
    %v225 = vunpack.c.l.b16 %v183
    %v226 = vunpack.c.l.b16 %v184
    %vm227 = vcmask 1041409
    %v228 = vsel %vm227, %v220, %v219
    %vm229 = vcmask 1042434
    %v230 = vsel %vm229, %v221, %v228
    %vm231 = vcmask 1043459
    %v232 = vsel %vm231, %v222, %v230
    %vm233 = vcmask 1044484
    %v234 = vsel %vm233, %v223, %v232
    %vm235 = vcmask 1045509
    %v236 = vsel %vm235, %v224, %v234
    %vm237 = vcmask 1046534
    %v238 = vsel %vm237, %v225, %v236
    %vm239 = vcmask 1047559
    %v240 = vsel %vm239, %v226, %v238
    %v241 = vpack.c.b16 %v240, %v240
    %v258 = vunpack.c.l.b16 %v185
    %v259 = vunpack.c.h.b16 %v185
    %v260 = vunpack.c.l.b16 %v186
    %v261 = vunpack.c.h.b16 %v186
    %v262 = vunpack.c.l.b16 %v187
    %v263 = vunpack.c.h.b16 %v187
    %v264 = vunpack.c.l.b16 %v188
    %v265 = vunpack.c.h.b16 %v188
    %v266 = vunpack.c.l.b16 %v189
    %v267 = vunpack.c.h.b16 %v189
    %v268 = vunpack.c.l.b16 %v190
    %v269 = vunpack.c.h.b16 %v190
    %v270 = vunpack.c.l.b16 %v191
    %v271 = vunpack.c.h.b16 %v191
    %v272 = vunpack.c.l.b16 %v192
    %v273 = vunpack.c.h.b16 %v192
    %v274 = vunpack.c.l.b16 %v193
    %v275 = vunpack.c.h.b16 %v193
    %v276 = vunpack.c.l.b16 %v194
    %v277 = vunpack.c.h.b16 %v194
    %v278 = vunpack.c.l.b16 %v195
    %v279 = vunpack.c.h.b16 %v195
    %v280 = vunpack.c.l.b16 %v196
    %v281 = vunpack.c.h.b16 %v196
    %v282 = vunpack.c.l.b16 %v197
    %v283 = vunpack.c.h.b16 %v197
    %v284 = vunpack.c.l.b16 %v198
    %v285 = vunpack.c.h.b16 %v198
    %v286 = vunpack.c.l.b16 %v199
    %v287 = vunpack.c.h.b16 %v199
    %v288 = vunpack.c.l.b16 %v200
    %v289 = vunpack.c.h.b16 %v200
    %v290 = vpack.c.b16 %v262, %v258
    %v291 = vpack.c.b16 %v263, %v259
    %v292 = vpack.c.b16 %v264, %v260
    %v293 = vpack.c.b16 %v265, %v261
    %v294 = vpack.c.b16 %v270, %v266
    %v295 = vpack.c.b16 %v271, %v267
    %v296 = vpack.c.b16 %v272, %v268
    %v297 = vpack.c.b16 %v273, %v269
    %v298 = vpack.c.b16 %v278, %v274
    %v299 = vpack.c.b16 %v279, %v275
    %v300 = vpack.c.b16 %v280, %v276
    %v301 = vpack.c.b16 %v281, %v277
    %v302 = vpack.c.b16 %v286, %v282
    %v303 = vpack.c.b16 %v287, %v283
    %v304 = vpack.c.b16 %v288, %v284
    %v305 = vpack.c.b16 %v289, %v285
    %v323 = vsel %vm120, %v241, 0
    %325 = vmatpush.bf16.msra.mxu0 0
    %326 = vmatpush.bf16.msra.mxu0 0
    %327 = vmatpush.bf16.msra.mxu0 0
    %328 = vmatpush.bf16.msra.mxu0 0
    %329 = vmatpush.bf16.msra.mxu0 %v302
    %330 = vmatpush.bf16.msra.mxu0 %v298
    %331 = vmatpush.bf16.msra.mxu0 %v294
    %332 = vmatpush.bf16.msra.mxu0 %v290
    %333 = vmatmul.bf16.gmra.mxu0 %v323
    %v334 = vpop.f32.mrf.mxu0
    %v335 = vadd.f32 %v203, %v334
    %v336 = vpop.f32.mrf.mxu0
    %337 = vdwg.mxu0
    %338 = vmatpush.bf16.msra.mxu0 0
    %339 = vmatpush.bf16.msra.mxu0 0
    %340 = vmatpush.bf16.msra.mxu0 0
    %341 = vmatpush.bf16.msra.mxu0 0
    %342 = vmatpush.bf16.msra.mxu0 %v303
    %343 = vmatpush.bf16.msra.mxu0 %v299
    %344 = vmatpush.bf16.msra.mxu0 %v295
    %345 = vmatpush.bf16.msra.mxu0 %v291
    %346 = vmatmul.bf16.gmra.mxu0 %v323
    %v347 = vpop.f32.mrf.mxu0
    %v348 = vadd.f32 %v204, %v347
    %v349 = vpop.f32.mrf.mxu0
    %350 = vdwg.mxu0
    %351 = vmatpush.bf16.msra.mxu0 0
    %352 = vmatpush.bf16.msra.mxu0 0
    %353 = vmatpush.bf16.msra.mxu0 0
    %354 = vmatpush.bf16.msra.mxu0 0
    %355 = vmatpush.bf16.msra.mxu0 %v304
    %356 = vmatpush.bf16.msra.mxu0 %v300
    %357 = vmatpush.bf16.msra.mxu0 %v296
    %358 = vmatpush.bf16.msra.mxu0 %v292
    %359 = vmatmul.bf16.gmra.mxu0 %v323
    %v360 = vpop.f32.mrf.mxu0
    %v361 = vadd.f32 %v205, %v360
    %v362 = vpop.f32.mrf.mxu0
    %363 = vdwg.mxu0
    %364 = vmatpush.bf16.msra.mxu0 0
    %365 = vmatpush.bf16.msra.mxu0 0
    %366 = vmatpush.bf16.msra.mxu0 0
    %367 = vmatpush.bf16.msra.mxu0 0
    %368 = vmatpush.bf16.msra.mxu0 %v305
    %369 = vmatpush.bf16.msra.mxu0 %v301
    %370 = vmatpush.bf16.msra.mxu0 %v297
    %371 = vmatpush.bf16.msra.mxu0 %v293
    %372 = vmatmul.bf16.gmra.mxu0 %v323
    %v373 = vpop.f32.mrf.mxu0
    %v374 = vadd.f32 %v206, %v373
    %v375 = vpop.f32.mrf.mxu0
    %376 = vdwg.mxu0
    %v377 = vmax.f32 %v335, 0.0
    %v378 = vmax.f32 %v348, 0.0
    %v379 = vmax.f32 %v361, 0.0
    %v380 = vmax.f32 %v374, 0.0
    %v381 = vpack.c.bf16 %v377, %v377
    %v382 = vpack.c.bf16 %v378, %v378
    %v383 = vpack.c.bf16 %v379, %v379
    %v384 = vpack.c.bf16 %v380, %v380
    %v385 = vld [vmem:[#allocation8] sm:$0xff]
    %v386 = vld [vmem:[#allocation8 + $0x8] sm:$0xff]
    %v387 = vld [vmem:[#allocation8 + $0x10] sm:$0xff]
    %v388 = vld [vmem:[#allocation8 + $0x18] sm:$0xff]
    %v389 = vld [vmem:[#allocation8 + $0x20] sm:$0xff]
    %v390 = vld [vmem:[#allocation8 + $0x28] sm:$0xff]
    %v391 = vld [vmem:[#allocation8 + $0x30] sm:$0xff]
    %v392 = vld [vmem:[#allocation8 + $0x38] sm:$0xff]
    %v393 = vld [vmem:[#allocation8 + $0x40] sm:$0xff]
    %v394 = vld [vmem:[#allocation8 + $0x48] sm:$0xff]
    %v395 = vld [vmem:[#allocation8 + $0x50] sm:$0xff]
    %v396 = vld [vmem:[#allocation8 + $0x58] sm:$0xff]
    %v397 = vld [vmem:[#allocation8 + $0x60] sm:$0xff]
    %v398 = vld [vmem:[#allocation8 + $0x68] sm:$0xff]
    %v399 = vld [vmem:[#allocation8 + $0x70] sm:$0xff]
    %v400 = vld [vmem:[#allocation8 + $0x78] sm:$0xff]
    %v401 = vld [vmem:[#allocation8 + $0x80] sm:$0xff]
    %v402 = vld [vmem:[#allocation8 + $0x88] sm:$0xff]
    %v403 = vld [vmem:[#allocation8 + $0x90] sm:$0xff]
    %v404 = vld [vmem:[#allocation8 + $0x98] sm:$0xff]
    %v405 = vld [vmem:[#allocation8 + $0xa0] sm:$0xff]
    %v406 = vld [vmem:[#allocation8 + $0xa8] sm:$0xff]
    %v407 = vld [vmem:[#allocation8 + $0xb0] sm:$0xff]
    %v408 = vld [vmem:[#allocation8 + $0xb8] sm:$0xff]
    %v409 = vld [vmem:[#allocation8 + $0xc0] sm:$0xff]
    %v410 = vld [vmem:[#allocation8 + $0xc8] sm:$0xff]
    %v411 = vld [vmem:[#allocation8 + $0xd0] sm:$0xff]
    %v412 = vld [vmem:[#allocation8 + $0xd8] sm:$0xff]
    %v413 = vld [vmem:[#allocation8 + $0xe0] sm:$0xff]
    %v414 = vld [vmem:[#allocation8 + $0xe8] sm:$0xff]
    %v415 = vld [vmem:[#allocation8 + $0xf0] sm:$0xff]
    %v416 = vld [vmem:[#allocation8 + $0xf8] sm:$0xff]
    %v417 = vld [vmem:[#allocation8 + $0x100] sm:$0xff]
    %v418 = vld [vmem:[#allocation8 + $0x108] sm:$0xff]
    %v419 = vld [vmem:[#allocation8 + $0x110] sm:$0xff]
    %v420 = vld [vmem:[#allocation8 + $0x118] sm:$0xff]
    %v421 = vld [vmem:[#allocation8 + $0x120] sm:$0xff]
    %v422 = vld [vmem:[#allocation8 + $0x128] sm:$0xff]
    %v423 = vld [vmem:[#allocation8 + $0x130] sm:$0xff]
    %v424 = vld [vmem:[#allocation8 + $0x138] sm:$0xff]
    %v425 = vld [vmem:[#allocation8 + $0x140] sm:$0xff]
    %v426 = vld [vmem:[#allocation8 + $0x148] sm:$0xff]
    %v427 = vld [vmem:[#allocation8 + $0x150] sm:$0xff]
    %v428 = vld [vmem:[#allocation8 + $0x158] sm:$0xff]
    %v429 = vld [vmem:[#allocation8 + $0x160] sm:$0xff]
    %v430 = vld [vmem:[#allocation8 + $0x168] sm:$0xff]
    %v431 = vld [vmem:[#allocation8 + $0x170] sm:$0xff]
    %v432 = vld [vmem:[#allocation8 + $0x178] sm:$0xff]
    %v433 = vld [vmem:[#allocation8 + $0x180] sm:$0xff]
    %v434 = vld [vmem:[#allocation8 + $0x188] sm:$0xff]
    %v435 = vld [vmem:[#allocation8 + $0x190] sm:$0xff]
    %v436 = vld [vmem:[#allocation8 + $0x198] sm:$0xff]
    %v437 = vld [vmem:[#allocation8 + $0x1a0] sm:$0xff]
    %v438 = vld [vmem:[#allocation8 + $0x1a8] sm:$0xff]
    %v439 = vld [vmem:[#allocation8 + $0x1b0] sm:$0xff]
    %v440 = vld [vmem:[#allocation8 + $0x1b8] sm:$0xff]
    %v441 = vld [vmem:[#allocation8 + $0x1c0] sm:$0xff]
    %v442 = vld [vmem:[#allocation8 + $0x1c8] sm:$0xff]
    %v443 = vld [vmem:[#allocation8 + $0x1d0] sm:$0xff]
    %v444 = vld [vmem:[#allocation8 + $0x1d8] sm:$0xff]
    %v445 = vld [vmem:[#allocation8 + $0x1e0] sm:$0xff]
    %v446 = vld [vmem:[#allocation8 + $0x1e8] sm:$0xff]
    %v447 = vld [vmem:[#allocation8 + $0x1f0] sm:$0xff]
    %v448 = vld [vmem:[#allocation8 + $0x1f8] sm:$0xff]
    %v449 = vld [vmem:[%s4] sm:$0x3]
    %v451 = vperm.slane %v449, 0
    %v452 = vperm.slane %v449, 1
    %v519 = vunpack.c.l.b16 %v385
    %v520 = vunpack.c.h.b16 %v385
    %v521 = vunpack.c.l.b16 %v386
    %v522 = vunpack.c.h.b16 %v386
    %v523 = vunpack.c.l.b16 %v387
    %v524 = vunpack.c.h.b16 %v387
    %v525 = vunpack.c.l.b16 %v388
    %v526 = vunpack.c.h.b16 %v388
    %v527 = vunpack.c.l.b16 %v389
    %v528 = vunpack.c.h.b16 %v389
    %v529 = vunpack.c.l.b16 %v390
    %v530 = vunpack.c.h.b16 %v390
    %v531 = vunpack.c.l.b16 %v391
    %v532 = vunpack.c.h.b16 %v391
    %v533 = vunpack.c.l.b16 %v392
    %v534 = vunpack.c.h.b16 %v392
    %v535 = vunpack.c.l.b16 %v393
    %v536 = vunpack.c.h.b16 %v393
    %v537 = vunpack.c.l.b16 %v394
    %v538 = vunpack.c.h.b16 %v394
    %v539 = vunpack.c.l.b16 %v395
    %v540 = vunpack.c.h.b16 %v395
    %v541 = vunpack.c.l.b16 %v396
    %v542 = vunpack.c.h.b16 %v396
    %v543 = vunpack.c.l.b16 %v397
    %v544 = vunpack.c.h.b16 %v397
    %v545 = vunpack.c.l.b16 %v398
    %v546 = vunpack.c.h.b16 %v398
    %v547 = vunpack.c.l.b16 %v399
    %v548 = vunpack.c.h.b16 %v399
    %v549 = vunpack.c.l.b16 %v400
    %v550 = vunpack.c.h.b16 %v400
    %v551 = vunpack.c.l.b16 %v401
    %v552 = vunpack.c.h.b16 %v401
    %v553 = vunpack.c.l.b16 %v402
    %v554 = vunpack.c.h.b16 %v402
    %v555 = vunpack.c.l.b16 %v403
    %v556 = vunpack.c.h.b16 %v403
    %v557 = vunpack.c.l.b16 %v404
    %v558 = vunpack.c.h.b16 %v404
    %v559 = vunpack.c.l.b16 %v405
    %v560 = vunpack.c.h.b16 %v405
    %v561 = vunpack.c.l.b16 %v406
    %v562 = vunpack.c.h.b16 %v406
    %v563 = vunpack.c.l.b16 %v407
    %v564 = vunpack.c.h.b16 %v407
    %v565 = vunpack.c.l.b16 %v408
    %v566 = vunpack.c.h.b16 %v408
    %v567 = vunpack.c.l.b16 %v409
    %v568 = vunpack.c.h.b16 %v409
    %v569 = vunpack.c.l.b16 %v410
    %v570 = vunpack.c.h.b16 %v410
    %v571 = vunpack.c.l.b16 %v411
    %v572 = vunpack.c.h.b16 %v411
    %v573 = vunpack.c.l.b16 %v412
    %v574 = vunpack.c.h.b16 %v412
    %v575 = vunpack.c.l.b16 %v413
    %v576 = vunpack.c.h.b16 %v413
    %v577 = vunpack.c.l.b16 %v414
    %v578 = vunpack.c.h.b16 %v414
    %v579 = vunpack.c.l.b16 %v415
    %v580 = vunpack.c.h.b16 %v415
    %v581 = vunpack.c.l.b16 %v416
    %v582 = vunpack.c.h.b16 %v416
    %v583 = vunpack.c.l.b16 %v417
    %v584 = vunpack.c.h.b16 %v417
    %v585 = vunpack.c.l.b16 %v418
    %v586 = vunpack.c.h.b16 %v418
    %v587 = vunpack.c.l.b16 %v419
    %v588 = vunpack.c.h.b16 %v419
    %v589 = vunpack.c.l.b16 %v420
    %v590 = vunpack.c.h.b16 %v420
    %v591 = vunpack.c.l.b16 %v421
    %v592 = vunpack.c.h.b16 %v421
    %v593 = vunpack.c.l.b16 %v422
    %v594 = vunpack.c.h.b16 %v422
    %v595 = vunpack.c.l.b16 %v423
    %v596 = vunpack.c.h.b16 %v423
    %v597 = vunpack.c.l.b16 %v424
    %v598 = vunpack.c.h.b16 %v424
    %v599 = vunpack.c.l.b16 %v425
    %v600 = vunpack.c.h.b16 %v425
    %v601 = vunpack.c.l.b16 %v426
    %v602 = vunpack.c.h.b16 %v426
    %v603 = vunpack.c.l.b16 %v427
    %v604 = vunpack.c.h.b16 %v427
    %v605 = vunpack.c.l.b16 %v428
    %v606 = vunpack.c.h.b16 %v428
    %v607 = vunpack.c.l.b16 %v429
    %v608 = vunpack.c.h.b16 %v429
    %v609 = vunpack.c.l.b16 %v430
    %v610 = vunpack.c.h.b16 %v430
    %v611 = vunpack.c.l.b16 %v431
    %v612 = vunpack.c.h.b16 %v431
    %v613 = vunpack.c.l.b16 %v432
    %v614 = vunpack.c.h.b16 %v432
    %v615 = vunpack.c.l.b16 %v433
    %v616 = vunpack.c.h.b16 %v433
    %v617 = vunpack.c.l.b16 %v434
    %v618 = vunpack.c.h.b16 %v434
    %v619 = vunpack.c.l.b16 %v435
    %v620 = vunpack.c.h.b16 %v435
    %v621 = vunpack.c.l.b16 %v436
    %v622 = vunpack.c.h.b16 %v436
    %v623 = vunpack.c.l.b16 %v437
    %v624 = vunpack.c.h.b16 %v437
    %v625 = vunpack.c.l.b16 %v438
    %v626 = vunpack.c.h.b16 %v438
    %v627 = vunpack.c.l.b16 %v439
    %v628 = vunpack.c.h.b16 %v439
    %v629 = vunpack.c.l.b16 %v440
    %v630 = vunpack.c.h.b16 %v440
    %v631 = vunpack.c.l.b16 %v441
    %v632 = vunpack.c.h.b16 %v441
    %v633 = vunpack.c.l.b16 %v442
    %v634 = vunpack.c.h.b16 %v442
    %v635 = vunpack.c.l.b16 %v443
    %v636 = vunpack.c.h.b16 %v443
    %v637 = vunpack.c.l.b16 %v444
    %v638 = vunpack.c.h.b16 %v444
    %v639 = vunpack.c.l.b16 %v445
    %v640 = vunpack.c.h.b16 %v445
    %v641 = vunpack.c.l.b16 %v446
    %v642 = vunpack.c.h.b16 %v446
    %v643 = vunpack.c.l.b16 %v447
    %v644 = vunpack.c.h.b16 %v447
    %v645 = vunpack.c.l.b16 %v448
    %v646 = vunpack.c.h.b16 %v448
    %v647 = vpack.c.b16 %v521, %v519
    %v648 = vpack.c.b16 %v522, %v520
    %v649 = vpack.c.b16 %v525, %v523
    %v650 = vpack.c.b16 %v526, %v524
    %v651 = vpack.c.b16 %v529, %v527
    %v652 = vpack.c.b16 %v530, %v528
    %v653 = vpack.c.b16 %v533, %v531
    %v654 = vpack.c.b16 %v534, %v532
    %v655 = vpack.c.b16 %v537, %v535
    %v656 = vpack.c.b16 %v538, %v536
    %v657 = vpack.c.b16 %v541, %v539
    %v658 = vpack.c.b16 %v542, %v540
    %v659 = vpack.c.b16 %v545, %v543
    %v660 = vpack.c.b16 %v546, %v544
    %v661 = vpack.c.b16 %v549, %v547
    %v662 = vpack.c.b16 %v550, %v548
    %v663 = vpack.c.b16 %v553, %v551
    %v664 = vpack.c.b16 %v554, %v552
    %v665 = vpack.c.b16 %v557, %v555
    %v666 = vpack.c.b16 %v558, %v556
    %v667 = vpack.c.b16 %v561, %v559
    %v668 = vpack.c.b16 %v562, %v560
    %v669 = vpack.c.b16 %v565, %v563
    %v670 = vpack.c.b16 %v566, %v564
    %v671 = vpack.c.b16 %v569, %v567
    %v672 = vpack.c.b16 %v570, %v568
    %v673 = vpack.c.b16 %v573, %v571
    %v674 = vpack.c.b16 %v574, %v572
    %v675 = vpack.c.b16 %v577, %v575
    %v676 = vpack.c.b16 %v578, %v576
    %v677 = vpack.c.b16 %v581, %v579
    %v678 = vpack.c.b16 %v582, %v580
    %v679 = vpack.c.b16 %v585, %v583
    %v680 = vpack.c.b16 %v586, %v584
    %v681 = vpack.c.b16 %v589, %v587
    %v682 = vpack.c.b16 %v590, %v588
    %v683 = vpack.c.b16 %v593, %v591
    %v684 = vpack.c.b16 %v594, %v592
    %v685 = vpack.c.b16 %v597, %v595
    %v686 = vpack.c.b16 %v598, %v596
    %v687 = vpack.c.b16 %v601, %v599
    %v688 = vpack.c.b16 %v602, %v600
    %v689 = vpack.c.b16 %v605, %v603
    %v690 = vpack.c.b16 %v606, %v604
    %v691 = vpack.c.b16 %v609, %v607
    %v692 = vpack.c.b16 %v610, %v608
    %v693 = vpack.c.b16 %v613, %v611
    %v694 = vpack.c.b16 %v614, %v612
    %v695 = vpack.c.b16 %v617, %v615
    %v696 = vpack.c.b16 %v618, %v616
    %v697 = vpack.c.b16 %v621, %v619
    %v698 = vpack.c.b16 %v622, %v620
    %v699 = vpack.c.b16 %v625, %v623
    %v700 = vpack.c.b16 %v626, %v624
    %v701 = vpack.c.b16 %v629, %v627
    %v702 = vpack.c.b16 %v630, %v628
    %v703 = vpack.c.b16 %v633, %v631
    %v704 = vpack.c.b16 %v634, %v632
    %v705 = vpack.c.b16 %v637, %v635
    %v706 = vpack.c.b16 %v638, %v636
    %v707 = vpack.c.b16 %v641, %v639
    %v708 = vpack.c.b16 %v642, %v640
    %v709 = vpack.c.b16 %v645, %v643
    %v710 = vpack.c.b16 %v646, %v644
    %775 = vmatpush.bf16.msra.mxu0 %v661
    %776 = vmatpush.bf16.msra.mxu0 %v659
    %777 = vmatpush.bf16.msra.mxu0 %v657
    %778 = vmatpush.bf16.msra.mxu0 %v655
    %779 = vmatpush.bf16.msra.mxu0 %v653
    %780 = vmatpush.bf16.msra.mxu0 %v651
    %781 = vmatpush.bf16.msra.mxu0 %v649
    %782 = vmatpush.bf16.msra.mxu0 %v647
    %783 = vmatmul.bf16.gmra.mxu0 %v381
    %v784 = vpop.f32.mrf.mxu0
    %v785 = vadd.f32 %v451, %v784
    %v786 = vpop.f32.mrf.mxu0
    %787 = vdwg.mxu0
    %788 = vmatpush.bf16.msra.mxu0 %v677
    %789 = vmatpush.bf16.msra.mxu0 %v675
    %790 = vmatpush.bf16.msra.mxu0 %v673
    %791 = vmatpush.bf16.msra.mxu0 %v671
    %792 = vmatpush.bf16.msra.mxu0 %v669
    %793 = vmatpush.bf16.msra.mxu0 %v667
    %794 = vmatpush.bf16.msra.mxu0 %v665
    %795 = vmatpush.bf16.msra.mxu0 %v663
    %796 = vmatmul.bf16.gmra.mxu0 %v382
    %v797 = vpop.f32.mrf.mxu0
    %v798 = vadd.f32 %v785, %v797
    %v799 = vpop.f32.mrf.mxu0
    %800 = vdwg.mxu0
    %801 = vmatpush.bf16.msra.mxu0 %v693
    %802 = vmatpush.bf16.msra.mxu0 %v691
    %803 = vmatpush.bf16.msra.mxu0 %v689
    %804 = vmatpush.bf16.msra.mxu0 %v687
    %805 = vmatpush.bf16.msra.mxu0 %v685
    %806 = vmatpush.bf16.msra.mxu0 %v683
    %807 = vmatpush.bf16.msra.mxu0 %v681
    %808 = vmatpush.bf16.msra.mxu0 %v679
    %809 = vmatmul.bf16.gmra.mxu0 %v383
    %v810 = vpop.f32.mrf.mxu0
    %v811 = vadd.f32 %v798, %v810
    %v812 = vpop.f32.mrf.mxu0
    %813 = vdwg.mxu0
    %814 = vmatpush.bf16.msra.mxu0 %v709
    %815 = vmatpush.bf16.msra.mxu0 %v707
    %816 = vmatpush.bf16.msra.mxu0 %v705
    %817 = vmatpush.bf16.msra.mxu0 %v703
    %818 = vmatpush.bf16.msra.mxu0 %v701
    %819 = vmatpush.bf16.msra.mxu0 %v699
    %820 = vmatpush.bf16.msra.mxu0 %v697
    %821 = vmatpush.bf16.msra.mxu0 %v695
    %822 = vmatmul.bf16.gmra.mxu0 %v384
    %v823 = vpop.f32.mrf.mxu0
    %v824 = vadd.f32 %v811, %v823
    %v825 = vpop.f32.mrf.mxu0
    %826 = vdwg.mxu0
    %827 = vmatpush.bf16.msra.mxu0 %v662
    %828 = vmatpush.bf16.msra.mxu0 %v660
    %829 = vmatpush.bf16.msra.mxu0 %v658
    %830 = vmatpush.bf16.msra.mxu0 %v656
    %831 = vmatpush.bf16.msra.mxu0 %v654
    %832 = vmatpush.bf16.msra.mxu0 %v652
    %833 = vmatpush.bf16.msra.mxu0 %v650
    %834 = vmatpush.bf16.msra.mxu0 %v648
    %835 = vmatmul.bf16.gmra.mxu0 %v381
    %v836 = vpop.f32.mrf.mxu0
    %v837 = vadd.f32 %v452, %v836
    %v838 = vpop.f32.mrf.mxu0
    %839 = vdwg.mxu0
    %840 = vmatpush.bf16.msra.mxu0 %v678
    %841 = vmatpush.bf16.msra.mxu0 %v676
    %842 = vmatpush.bf16.msra.mxu0 %v674
    %843 = vmatpush.bf16.msra.mxu0 %v672
    %844 = vmatpush.bf16.msra.mxu0 %v670
    %845 = vmatpush.bf16.msra.mxu0 %v668
    %846 = vmatpush.bf16.msra.mxu0 %v666
    %847 = vmatpush.bf16.msra.mxu0 %v664
    %848 = vmatmul.bf16.gmra.mxu0 %v382
    %v849 = vpop.f32.mrf.mxu0
    %v850 = vadd.f32 %v837, %v849
    %v851 = vpop.f32.mrf.mxu0
    %852 = vdwg.mxu0
    %853 = vmatpush.bf16.msra.mxu0 %v694
    %854 = vmatpush.bf16.msra.mxu0 %v692
    %855 = vmatpush.bf16.msra.mxu0 %v690
    %856 = vmatpush.bf16.msra.mxu0 %v688
    %857 = vmatpush.bf16.msra.mxu0 %v686
    %858 = vmatpush.bf16.msra.mxu0 %v684
    %859 = vmatpush.bf16.msra.mxu0 %v682
    %860 = vmatpush.bf16.msra.mxu0 %v680
    %861 = vmatmul.bf16.gmra.mxu0 %v383
    %v862 = vpop.f32.mrf.mxu0
    %v863 = vadd.f32 %v850, %v862
    %v864 = vpop.f32.mrf.mxu0
    %865 = vdwg.mxu0
    %866 = vmatpush.bf16.msra.mxu0 %v710
    %867 = vmatpush.bf16.msra.mxu0 %v708
    %868 = vmatpush.bf16.msra.mxu0 %v706
    %869 = vmatpush.bf16.msra.mxu0 %v704
    %870 = vmatpush.bf16.msra.mxu0 %v702
    %871 = vmatpush.bf16.msra.mxu0 %v700
    %872 = vmatpush.bf16.msra.mxu0 %v698
    %873 = vmatpush.bf16.msra.mxu0 %v696
    %874 = vmatmul.bf16.gmra.mxu0 %v384
    %v875 = vpop.f32.mrf.mxu0
    %v876 = vadd.f32 %v863, %v875
    %v877 = vpop.f32.mrf.mxu0
    %878 = vdwg.mxu0
    %v879 = vmax.f32 %v824, 0.0
    %v880 = vmax.f32 %v876, 0.0
    %v881 = vpack.c.bf16 %v879, %v879
    %v882 = vpack.c.bf16 %v880, %v880
    %v883 = vld [vmem:[#allocation10] sm:$0xf]
    %v884 = vld [vmem:[#allocation10 + $0x4] sm:$0xf]
    %v885 = vld [vmem:[#allocation10 + $0x8] sm:$0xf]
    %v886 = vld [vmem:[#allocation10 + $0xc] sm:$0xf]
    %v887 = vld [vmem:[#allocation10 + $0x10] sm:$0xf]
    %v888 = vld [vmem:[#allocation10 + $0x14] sm:$0xf]
    %v889 = vld [vmem:[#allocation10 + $0x18] sm:$0xf]
    %v890 = vld [vmem:[#allocation10 + $0x1c] sm:$0xf]
    %v891 = vld [vmem:[#allocation10 + $0x20] sm:$0xf]
    %v892 = vld [vmem:[#allocation10 + $0x24] sm:$0xf]
    %v893 = vld [vmem:[#allocation10 + $0x28] sm:$0xf]
    %v894 = vld [vmem:[#allocation10 + $0x2c] sm:$0xf]
    %v895 = vld [vmem:[#allocation10 + $0x30] sm:$0xf]
    %v896 = vld [vmem:[#allocation10 + $0x34] sm:$0xf]
    %v897 = vld [vmem:[#allocation10 + $0x38] sm:$0xf]
    %v898 = vld [vmem:[#allocation10 + $0x3c] sm:$0xf]
    %v899 = vld [vmem:[#allocation10 + $0x40] sm:$0xf]
    %v900 = vld [vmem:[#allocation10 + $0x44] sm:$0xf]
    %v901 = vld [vmem:[#allocation10 + $0x48] sm:$0xf]
    %v902 = vld [vmem:[#allocation10 + $0x4c] sm:$0xf]
    %v903 = vld [vmem:[#allocation10 + $0x50] sm:$0xf]
    %v904 = vld [vmem:[#allocation10 + $0x54] sm:$0xf]
    %v905 = vld [vmem:[#allocation10 + $0x58] sm:$0xf]
    %v906 = vld [vmem:[#allocation10 + $0x5c] sm:$0xf]
    %v907 = vld [vmem:[#allocation10 + $0x60] sm:$0xf]
    %v908 = vld [vmem:[#allocation10 + $0x64] sm:$0xf]
    %v909 = vld [vmem:[#allocation10 + $0x68] sm:$0xf]
    %v910 = vld [vmem:[#allocation10 + $0x6c] sm:$0xf]
    %v911 = vld [vmem:[#allocation10 + $0x70] sm:$0xf]
    %v912 = vld [vmem:[#allocation10 + $0x74] sm:$0xf]
    %v913 = vld [vmem:[#allocation10 + $0x78] sm:$0xf]
    %v914 = vld [vmem:[#allocation10 + $0x7c] sm:$0xf]
    %v915 = vld [vmem:[%s6] sm:$0x1]
    %v917 = vperm.slane %v915, 0
    %v951 = vunpack.c.l.b16 %v883
    %v952 = vunpack.c.l.b16 %v884
    %v953 = vunpack.c.l.b16 %v885
    %v954 = vunpack.c.l.b16 %v886
    %v955 = vunpack.c.l.b16 %v887
    %v956 = vunpack.c.l.b16 %v888
    %v957 = vunpack.c.l.b16 %v889
    %v958 = vunpack.c.l.b16 %v890
    %v959 = vunpack.c.l.b16 %v891
    %v960 = vunpack.c.l.b16 %v892
    %v961 = vunpack.c.l.b16 %v893
    %v962 = vunpack.c.l.b16 %v894
    %v963 = vunpack.c.l.b16 %v895
    %v964 = vunpack.c.l.b16 %v896
    %v965 = vunpack.c.l.b16 %v897
    %v966 = vunpack.c.l.b16 %v898
    %v967 = vunpack.c.l.b16 %v899
    %v968 = vunpack.c.l.b16 %v900
    %v969 = vunpack.c.l.b16 %v901
    %v970 = vunpack.c.l.b16 %v902
    %v971 = vunpack.c.l.b16 %v903
    %v972 = vunpack.c.l.b16 %v904
    %v973 = vunpack.c.l.b16 %v905
    %v974 = vunpack.c.l.b16 %v906
    %v975 = vunpack.c.l.b16 %v907
    %v976 = vunpack.c.l.b16 %v908
    %v977 = vunpack.c.l.b16 %v909
    %v978 = vunpack.c.l.b16 %v910
    %v979 = vunpack.c.l.b16 %v911
    %v980 = vunpack.c.l.b16 %v912
    %v981 = vunpack.c.l.b16 %v913
    %v982 = vunpack.c.l.b16 %v914
    %v983 = vpack.c.b16 %v952, %v951
    %v984 = vpack.c.b16 %v954, %v953
    %v985 = vpack.c.b16 %v956, %v955
    %v986 = vpack.c.b16 %v958, %v957
    %v987 = vpack.c.b16 %v960, %v959
    %v988 = vpack.c.b16 %v962, %v961
    %v989 = vpack.c.b16 %v964, %v963
    %v990 = vpack.c.b16 %v966, %v965
    %v991 = vpack.c.b16 %v968, %v967
    %v992 = vpack.c.b16 %v970, %v969
    %v993 = vpack.c.b16 %v972, %v971
    %v994 = vpack.c.b16 %v974, %v973
    %v995 = vpack.c.b16 %v976, %v975
    %v996 = vpack.c.b16 %v978, %v977
    %v997 = vpack.c.b16 %v980, %v979
    %v998 = vpack.c.b16 %v982, %v981
    %1015 = vmatpush.bf16.msra.mxu0 %v990
    %1016 = vmatpush.bf16.msra.mxu0 %v989
    %1017 = vmatpush.bf16.msra.mxu0 %v988
    %1018 = vmatpush.bf16.msra.mxu0 %v987
    %1019 = vmatpush.bf16.msra.mxu0 %v986
    %1020 = vmatpush.bf16.msra.mxu0 %v985
    %1021 = vmatpush.bf16.msra.mxu0 %v984
    %1022 = vmatpush.bf16.msra.mxu0 %v983
    %1023 = vmatmul.bf16.gmra.mxu0 %v881
    %v1024 = vpop.f32.mrf.mxu0
    %v1025 = vadd.f32 %v917, %v1024
    %v1026 = vpop.f32.mrf.mxu0
    %1027 = vdwg.mxu0
    %1028 = vmatpush.bf16.msra.mxu0 %v998
    %1029 = vmatpush.bf16.msra.mxu0 %v997
    %1030 = vmatpush.bf16.msra.mxu0 %v996
    %1031 = vmatpush.bf16.msra.mxu0 %v995
    %1032 = vmatpush.bf16.msra.mxu0 %v994
    %1033 = vmatpush.bf16.msra.mxu0 %v993
    %1034 = vmatpush.bf16.msra.mxu0 %v992
    %1035 = vmatpush.bf16.msra.mxu0 %v991
    %1036 = vmatmul.bf16.gmra.mxu0 %v882
    %v1037 = vpop.f32.mrf.mxu0
    %v1038 = vadd.f32 %v1025, %v1037
    %v1039 = vpop.f32.mrf.mxu0
    %1040 = vdwg.mxu0
    %1041 = vst [vmem:[#allocation11] sm:$0xff] %v1038
    // Predicated region
    $region50: #{tpu_custom_call.1} parent=1 // pred_check
      _
    $region51: #{tpu_custom_call.1} parent=1 // pred_check_branch
      %1043 = sbr.rel (0) target = $region53
    $region52: #{tpu_custom_call.1} parent=1 // pred_region
      %1045 = vsyncadd [#allocation4], 0
      %s1047 = sshll.u32 [#allocation11], 4
      %s1048 = int_to_ptr.vmem [resolvable:$true] %s1047
      %s1049 = sshll.u32 %s7, 4
      %s1050 = int_to_ptr.hbm [resolvable:$true] %s1049
      %1052 = dma.vmem_to_hbm [thread:$0]  %s1048, 128, %s1050, [#allocation4]
    $region53: #{tpu_custom_call.1} parent=1 // pred_fallthru
      _
    // Predicated region
    $region54: #{tpu_custom_call.1} parent=1 // pred_check
      _
    $region55: #{tpu_custom_call.1} parent=1 // pred_check_branch
      %1054 = sbr.rel (0) target = $region57
    $region56: #{tpu_custom_call.1} parent=1 // pred_region
      %1056 = dma.done [#allocation4], 128
    $region57: #{tpu_custom_call.1} parent=1 // pred_fallthru
      _
    %1057 = vsyncpa [#allocation3], 1
    %1058 = vsyncpa [#allocation6], 1
    %1059 = vsyncpa [#allocation9], 1
    %1060 = vsyncpa [#allocation4], 1

</llo_original>
